<compile_context>
chip_gen: v5e
topology: v5e:2x2
jax: 0.10.0
libtpu: 0.0.40
codegen_flags: <defaults>
</compile_context>

<pallas_src>
import functools

import jax
import jax.numpy as jnp
from jax.experimental import pallas as pl
from jax.experimental.pallas import tpu as pltpu

LANE = 128
SUBLANE = 8
DEFAULT_TILE_N = 1024          # upper bound on rows per grid step
MIN_GRID_STEPS = 2             # v7x has 2 TensorCores; also enables DMA/compute overlap
VMEM_BUDGET_BYTES = 24 << 20   # conservative tile budget: fits v7x/v5e scoped VMEM


def _round_up(x, m):
    return (x + m - 1) // m * m


def _fused_linear_kernel(x_ref, wc_ref, bc_ref, out_ref):
    """y = x @ Wc + bc, with Wc = W0ᵀ W1ᵀ and bc = b0 W1ᵀ + b1 folded at prep time.

    MXU operands use the folded weight's dtype (bf16 or f32); accumulation is f32 and
    the bias is added in f32.
    """
    x = x_ref[...].astype(wc_ref.dtype)
    y = jnp.dot(x, wc_ref[...], preferred_element_type=jnp.float32) + bc_ref[...]
    out_ref[...] = y.astype(out_ref.dtype)


def prepare_params(w0, b0, w1, b1, compute_dtype=jnp.bfloat16):
    """One-time parameter prep (hoisted out of the hot path).

    PyTorch layout in:  w0 (bottleneck, input_dim), b0 (bottleneck,),
                        w1 (class_num, bottleneck), b1 (class_num,).
    The two Linears are folded in f32 (valid because there is no nonlinearity between
    them), the class dim is zero-padded to a multiple of 128 lanes for lane-dense
    stores, and the folded weight is cast once to compute_dtype (bias kept f32).
    """
    w0 = w0.astype(jnp.float32)
    b0 = b0.astype(jnp.float32)
    w1 = w1.astype(jnp.float32)
    b1 = b1.astype(jnp.float32)

    input_dim = w0.shape[1]
    class_num = w1.shape[0]
    c_pad = _round_up(class_num, LANE)

    wc = w0.T @ w1.T               # (input_dim, class_num), folded in f32
    bc = b0 @ w1.T + b1            # (class_num,)

    wc_p = jnp.zeros((input_dim, c_pad), compute_dtype)
    wc_p = wc_p.at[:, :class_num].set(wc.astype(compute_dtype))
    bc_p = jnp.zeros((1, c_pad), jnp.float32)
    bc_p = bc_p.at[:, :class_num].set(bc[None, :])
    return wc_p, bc_p


@functools.partial(jax.jit, static_argnames=("class_num", "tile_n", "out_dtype"))
def feat_classifier_two_forward(x, wc, bc, *, class_num, tile_n=DEFAULT_TILE_N,
                                out_dtype=None):
    """x: (N, input_dim).  (wc, bc) must come from prepare_params()."""
    n, d = x.shape
    c_pad = wc.shape[1]
    out_dtype = x.dtype if out_dtype is None else jnp.dtype(out_dtype)
    out_itemsize = jnp.dtype(out_dtype).itemsize

    # ---- VMEM-budget-aware row tile (multiple of 8) ----------------------------------
    resident = wc.size * wc.dtype.itemsize + bc.size * bc.dtype.itemsize  # Buffered(1)
    per_row = 2 * d * x.dtype.itemsize + 2 * c_pad * out_itemsize         # dbl-buffered
    tn_vmem = max(SUBLANE, (VMEM_BUDGET_BYTES - resident) // max(per_row, 1))
    tn_cap = max(SUBLANE, (min(tile_n, tn_vmem) // SUBLANE) * SUBLANE)

    # ---- grid sizing: >= MIN_GRID_STEPS steps when the batch allows it ---------------
    steps = max(MIN_GRID_STEPS, pl.cdiv(n, tn_cap))
    steps = max(1, min(steps, pl.cdiv(n, SUBLANE)))   # never below 8-row tiles
    tn = _round_up(pl.cdiv(n, steps), SUBLANE)
    grid = (pl.cdiv(n, tn),)                          # ragged last tile handled by Pallas

    footprint = resident + tn * per_row
    vmem_limit = int(min(max(2 * footprint, 16 << 20), 48 << 20))

    flops = 2 * n * d * c_pad
    bytes_accessed = (n * d * x.dtype.itemsize + resident + n * c_pad * out_itemsize)

    out = pl.pallas_call(
        _fused_linear_kernel,
        out_shape=jax.ShapeDtypeStruct((n, c_pad), out_dtype),
        grid=grid,
        in_specs=[
            # x: streamed row tiles, double-buffered by default.
            pl.BlockSpec((tn, d), lambda i: (i, 0)),
            # Folded weight / bias: constant index_map -> DMA'd once; single-buffered.
            pl.BlockSpec((d, c_pad), lambda i: (0, 0), pipeline_mode=pl.Buffered(1)),
            pl.BlockSpec((1, c_pad), lambda i: (0, 0), pipeline_mode=pl.Buffered(1)),
        ],
        out_specs=pl.BlockSpec((tn, c_pad), lambda i: (i, 0)),
        compiler_params=pltpu.CompilerParams(
            dimension_semantics=("parallel",),
            vmem_limit_bytes=vmem_limit),
        cost_estimate=pl.CostEstimate(flops=flops, transcendentals=0,
                                      bytes_accessed=bytes_accessed),
    )(x, wc, bc)

    # Slice away the lane padding of the class dimension (rows were never padded).
    return out[:, :class_num]


def xavier_normal(key, out_features, in_features, dtype=jnp.float32):
    # Matches nn.init.xavier_normal_ (gain=1): std = sqrt(2 / (fan_in + fan_out))
    std = (2.0 / (in_features + out_features)) ** 0.5
    return std * jax.random.normal(key, (out_features, in_features), dtype=dtype)


if __name__ == "__main__":
    batch = 8
    input_dim = 32
    bottleneck_dim = 256   # module default
    class_num = 16

    key = jax.random.PRNGKey(0)
    kx, k0, k1, kx2 = jax.random.split(key, 4)

    x = jax.random.normal(kx, (batch, input_dim), dtype=jnp.float32)

    # PyTorch Linear layout: weight (out, in), bias (out,); xavier_normal + zero bias.
    w0 = xavier_normal(k0, bottleneck_dim, input_dim)
    b0 = jnp.zeros((bottleneck_dim,), dtype=jnp.float32)
    w1 = xavier_normal(k1, class_num, bottleneck_dim)
    b1 = jnp.zeros((class_num,), dtype=jnp.float32)

    # Pure-JAX reference of the PyTorch forward (two bare Linears, no activation).
    ref = (x @ w0.T + b0) @ w1.T + b1

    # --- f32 folded path: tight correctness check ---
    wc32, bc32 = prepare_params(w0, b0, w1, b1, compute_dtype=jnp.float32)
    y32 = jax.block_until_ready(
        feat_classifier_two_forward(x, wc32, bc32, class_num=class_num))
    assert y32.shape == (batch, class_num)
    assert jnp.allclose(y32, ref, atol=1e-4, rtol=1e-4)

    # --- bf16 folded path (f32 accumulation): classifier-head tolerance ---
    wcbf, bcbf = prepare_params(w0, b0, w1, b1, compute_dtype=jnp.bfloat16)
    ybf = jax.block_until_ready(
        feat_classifier_two_forward(x, wcbf, bcbf, class_num=class_num))
    assert ybf.shape == (batch, class_num)
    assert jnp.allclose(ybf, ref, atol=5e-2, rtol=5e-2)

    # --- ragged multi-tile batch: exercises grid > 1 and edge-block masking (no pad) ---
    n2 = 200
    x2 = jax.random.normal(kx2, (n2, input_dim), dtype=jnp.float32)
    ref2 = (x2 @ w0.T + b0) @ w1.T + b1
    y2 = jax.block_until_ready(
        feat_classifier_two_forward(x2, wc32, bc32, class_num=class_num))
    assert y2.shape == (n2, class_num)
    assert jnp.allclose(y2, ref2, atol=1e-4, rtol=1e-4)

    print("KERNEL_OK")
</pallas_src>

<mosaic_0001>
module attributes {stable_mosaic.version = 11 : i64} {
  func.func @_fused_linear_kernel(%arg0: i32, %arg1: memref<8x32xf32, #tpu.memory_space<vmem>>, %arg2: memref<32x128xf32, #tpu.memory_space<vmem>>, %arg3: memref<1x128xf32, #tpu.memory_space<vmem>>, %arg4: memref<8x128xf32, #tpu.memory_space<vmem>>) attributes {dimension_semantics = [#tpu.dimension_semantics<parallel>], iteration_bounds = array<i64: 1>, scalar_prefetch = 0 : i64, scratch_operands = 0 : i64, tpu.core_type = #tpu.core_type<tc>, window_params = [{transform_indices = @transform_0, window_bounds = array<i64: 8, 32>}, {pipeline_mode = #tpu.pipeline_mode<synchronous>, transform_indices = @transform_1, window_bounds = array<i64: 32, 128>}, {pipeline_mode = #tpu.pipeline_mode<synchronous>, transform_indices = @transform_2, window_bounds = array<i64: 1, 128>}, {transform_indices = @transform_3, window_bounds = array<i64: 8, 128>}]} {
    %c0 = arith.constant 0 : index
    %c0_0 = arith.constant 0 : index
    %0 = vector.load %arg1[%c0, %c0_0] : memref<8x32xf32, #tpu.memory_space<vmem>>, vector<8x32xf32>
    %c0_1 = arith.constant 0 : index
    %c0_2 = arith.constant 0 : index
    %1 = vector.load %arg2[%c0_1, %c0_2] : memref<32x128xf32, #tpu.memory_space<vmem>>, vector<32x128xf32>
    %cst = arith.constant dense<0.000000e+00> : vector<8x128xf32>
    %2 = tpu.matmul %0, %1, %cst {dimension_numbers = #tpu.dot_dimension_numbers<[1], [0], [0], [1], [0, 0, 1, 1], [], []>} : vector<8x32xf32>, vector<32x128xf32>, vector<8x128xf32> -> vector<8x128xf32>
    %c0_3 = arith.constant 0 : index
    %c0_4 = arith.constant 0 : index
    %3 = vector.load %arg3[%c0_3, %c0_4] : memref<1x128xf32, #tpu.memory_space<vmem>>, vector<1x128xf32>
    %4 = vector.broadcast %3 : vector<1x128xf32> to vector<8x128xf32>
    %5 = arith.addf %2, %4 : vector<8x128xf32>
    %c0_5 = arith.constant 0 : index
    %c0_6 = arith.constant 0 : index
    %6 = vector.load %arg4[%c0_5, %c0_6] : memref<8x128xf32, #tpu.memory_space<vmem>>, vector<8x128xf32>
    tpu.vector_store %arg4[%c0_5, %c0_6], %5 {strides = array<i32>} : memref<8x128xf32, #tpu.memory_space<vmem>>, vector<8x128xf32>,
    return
  }
  func.func @transform_0(%arg0: i32) -> (i32, i32) {
    %c0_i32 = arith.constant 0 : i32
    %c0_i32_0 = arith.constant 0 : i32
    return %arg0, %c0_i32 : i32, i32
  }
  func.func @transform_1(%arg0: i32) -> (i32, i32) {
    %c0_i32 = arith.constant 0 : i32
    %c0_i32_0 = arith.constant 0 : i32
    %c0_i32_1 = arith.constant 0 : i32
    return %c0_i32, %c0_i32_0 : i32, i32
  }
  func.func @transform_2(%arg0: i32) -> (i32, i32) {
    %c0_i32 = arith.constant 0 : i32
    %c0_i32_0 = arith.constant 0 : i32
    %c0_i32_1 = arith.constant 0 : i32
    return %c0_i32, %c0_i32_0 : i32, i32
  }
  func.func @transform_3(%arg0: i32) -> (i32, i32) {
    %c0_i32 = arith.constant 0 : i32
    %c0_i32_0 = arith.constant 0 : i32
    return %arg0, %c0_i32 : i32, i32
  }
}

</mosaic_0001>

<llo_original>
// kernel: feat_classifier_two_forward.1
$region0: #{feat_classifier_two_forward.1}
  #allocation0 [shape = 'u32[]', space=smem, size = 0x4, offset = 0x4, fixed_abs, tag = 'smem constant byte address 0x4 - core index']
  #allocation1 [shape = 'u32[72,128]{1,0:T(1,128)}', space=vmem, size = 0x9000, scoped, tag = 'internal scratch']
  %s0 = inlined_call_operand.hbm [shape: f32[8,32], index: 0, kind: input, shape index: {}]
  %s1 = inlined_call_operand.hbm [shape: f32[32,128], index: 1, kind: input, shape index: {}]
  %s2 = inlined_call_operand.vmem [shape: f32[1,128], index: 2, kind: input, shape index: {}]
  %s3 = inlined_call_operand.hbm [shape: f32[8,128], index: 3, kind: output, shape index: {}]
  %s4 = sld [smem:[#allocation0]]
  $region30: #{feat_classifier_two_forward.1} parent=0
    _
  %s6 = ssub.s32 1, %s4
  %s7 = scalar_select 0, %s6, %s4
  $region1: #{feat_classifier_two_forward.1} parent=0
    #allocation2 [shape = 'u8[4096]{0}', space=vmem, size = 0x1000, scoped, tag = 'input window, operand 0, single buffered']
    #allocation3 [shape = 's32[1]{0}', space=sflag, size = 0x4, scoped, tag = 'scoped memory for feat_classifier_two_forward.1']
    #allocation4 [shape = 's32[1]{0}', space=sflag, size = 0x4, scoped, tag = 'scoped memory for feat_classifier_two_forward.1']
    #allocation5 [shape = 'u8[16384]{0}', space=vmem, size = 0x4000, scoped, tag = 'input window, operand 1, single buffered']
    #allocation6 [shape = 's32[1]{0}', space=sflag, size = 0x4, scoped, tag = 'scoped memory for feat_classifier_two_forward.1']
    #allocation7 [shape = 'u8[4096]{0}', space=vmem, size = 0x1000, scoped, tag = 'output window, operand 0, single buffered']
    %8 = vsyncpa [#allocation3], 0
    %9 = vsyncpa [#allocation6], 0
    %10 = vsyncpa [#allocation4], 0
    // Predicated region
    $region2: #{feat_classifier_two_forward.1} parent=1 // pred_check
      _
    $region3: #{feat_classifier_two_forward.1} parent=1 // pred_check_branch
      %12 = sbr.rel (0) target = $region5
    $region4: #{feat_classifier_two_forward.1} parent=1 // pred_region
      %14 = vsyncadd [#allocation3], 0
      %s16 = sshll.u32 %s0, 4
      %s17 = int_to_ptr.hbm [resolvable:$true] %s16
      %s18 = sshll.u32 [#allocation2], 4
      %s19 = int_to_ptr.vmem [resolvable:$true] %s18
      %21 = dma.hbm_to_vmem [thread:$0]  %s17, 128, %s19, [#allocation3]
    $region5: #{feat_classifier_two_forward.1} parent=1 // pred_fallthru
      _
    // Predicated region
    $region6: #{feat_classifier_two_forward.1} parent=1 // pred_check
      _
    $region7: #{feat_classifier_two_forward.1} parent=1 // pred_check_branch
      %23 = sbr.rel (0) target = $region9
    $region8: #{feat_classifier_two_forward.1} parent=1 // pred_region
      %25 = vsyncadd [#allocation6], 0
      %s26 = sshll.u32 %s1, 4
      %s27 = int_to_ptr.hbm [resolvable:$true] %s26
      %s28 = sshll.u32 [#allocation5], 4
      %s29 = int_to_ptr.vmem [resolvable:$true] %s28
      %34 = dma.hbm_to_vmem [thread:$0]  %s27, 512, %s29, [#allocation6], 128, 128, 8
    $region9: #{feat_classifier_two_forward.1} parent=1 // pred_fallthru
      _
    // Predicated region
    $region10: #{feat_classifier_two_forward.1} parent=1 // pred_check
      _
    $region11: #{feat_classifier_two_forward.1} parent=1 // pred_check_branch
      %36 = sbr.rel (0) target = $region13
    $region12: #{feat_classifier_two_forward.1} parent=1 // pred_region
      _
    $region13: #{feat_classifier_two_forward.1} parent=1 // pred_fallthru
      _
    // Predicated region
    $region14: #{feat_classifier_two_forward.1} parent=1 // pred_check
      _
    $region15: #{feat_classifier_two_forward.1} parent=1 // pred_check_branch
      %38 = sbr.rel (0) target = $region17
    $region16: #{feat_classifier_two_forward.1} parent=1 // pred_region
      %40 = dma.done [#allocation3], 128
    $region17: #{feat_classifier_two_forward.1} parent=1 // pred_fallthru
      _
    // Predicated region
    $region18: #{feat_classifier_two_forward.1} parent=1 // pred_check
      _
    $region19: #{feat_classifier_two_forward.1} parent=1 // pred_check_branch
      %42 = sbr.rel (0) target = $region21
    $region20: #{feat_classifier_two_forward.1} parent=1 // pred_region
      %44 = dma.done [#allocation6], 512
    $region21: #{feat_classifier_two_forward.1} parent=1 // pred_fallthru
      _
    %v45 = vld [vmem:[#allocation2] sm:$0xff]
    %v46 = vld [vmem:[#allocation5] sm:$0xff]
    %v47 = vld [vmem:[#allocation5 + $0x8] sm:$0xff]
    %v48 = vld [vmem:[#allocation5 + $0x10] sm:$0xff]
    %v49 = vld [vmem:[#allocation5 + $0x18] sm:$0xff]
    %v50 = vld [vmem:[%s2] sm:$0x1]
    %v52 = vperm.slane %v50, 0
    %vm54 = vcmask 261120
    %v56 = vsel %vm54, %v45, 0
    %58 = vmatpush.msra.mxu0 0.0
    %59 = vmatpush.msra.mxu0 0.0
    %60 = vmatpush.msra.mxu0 0.0
    %61 = vmatpush.msra.mxu0 0.0
    %62 = vmatpush.msra.mxu0 0.0
    %63 = vmatpush.msra.mxu0 0.0
    %64 = vmatpush.msra.mxu0 0.0
    %65 = vmatpush.msra.mxu0 0.0
    %66 = vmatpush.msra.mxu0 0.0
    %67 = vmatpush.msra.mxu0 0.0
    %68 = vmatpush.msra.mxu0 0.0
    %69 = vmatpush.msra.mxu0 0.0
    %70 = vmatpush.msra.mxu0 %v49
    %71 = vmatpush.msra.mxu0 %v48
    %72 = vmatpush.msra.mxu0 %v47
    %73 = vmatpush.msra.mxu0 %v46
    %74 = vmatmul.f32.gmra.mxu0 %v56
    %v75 = vpop.f32.mrf.mxu0
    %v76 = vadd.f32 %v52, %v75
    %77 = vdwg.mxu0
    %78 = vst [vmem:[#allocation7] sm:$0xff] %v76
    // Predicated region
    $region22: #{feat_classifier_two_forward.1} parent=1 // pred_check
      _
    $region23: #{feat_classifier_two_forward.1} parent=1 // pred_check_branch
      %80 = sbr.rel (0) target = $region25
    $region24: #{feat_classifier_two_forward.1} parent=1 // pred_region
      %82 = vsyncadd [#allocation4], 0
      %s84 = sshll.u32 [#allocation7], 4
      %s85 = int_to_ptr.vmem [resolvable:$true] %s84
      %s86 = sshll.u32 %s3, 4
      %s87 = int_to_ptr.hbm [resolvable:$true] %s86
      %89 = dma.vmem_to_hbm [thread:$0]  %s85, 128, %s87, [#allocation4]
    $region25: #{feat_classifier_two_forward.1} parent=1 // pred_fallthru
      _
    // Predicated region
    $region26: #{feat_classifier_two_forward.1} parent=1 // pred_check
      _
    $region27: #{feat_classifier_two_forward.1} parent=1 // pred_check_branch
      %91 = sbr.rel (0) target = $region29
    $region28: #{feat_classifier_two_forward.1} parent=1 // pred_region
      %93 = dma.done [#allocation4], 128
    $region29: #{feat_classifier_two_forward.1} parent=1 // pred_fallthru
      _
    %94 = vsyncpa [#allocation3], 1
    %95 = vsyncpa [#allocation6], 1
    %96 = vsyncpa [#allocation4], 1

</llo_original>
